<compile_context>
chip_gen: v7x
topology: tpu7x:2x2x1
jax: 0.10.0
libtpu: 0.0.40
codegen_flags: <defaults>
</compile_context>

<pallas_src>
import jax
import jax.numpy as jnp
from jax.experimental import pallas as pl
from jax.experimental.pallas import tpu as pltpu


def _weighted_kernel(x_ref, lap_ref, w_ref, b_ref, o_ref):
    # x_ref  : (1, N_pad, Bt*F)  Bt batch elements lane-packed along the last axis
    # lap_ref: (N_pad, N_pad)    zero-padded Laplacian (grid-invariant, VMEM resident)
    # w_ref  : (Bt*F, Bt*D)      block-diagonal weight (grid-invariant, VMEM resident)
    # b_ref  : (1, Bt*D)         bias tiled Bt times along lanes (f32)
    # o_ref  : (1, N_pad, Bt*D)  lane-packed output (lane-dense store)
    xw = jnp.dot(x_ref[0], w_ref[...], preferred_element_type=jnp.float32)  # (N_pad, Bt*D)
    out = jnp.dot(lap_ref[...], xw.astype(lap_ref.dtype),
                  preferred_element_type=jnp.float32)                        # (N_pad, Bt*D)
    o_ref[0] = (out + b_ref[...]).astype(o_ref.dtype)


def _lap_only_kernel(x_ref, lap_ref, o_ref):
    # is_weight=False path: out = lap @ x on the lane-packed batch group.
    out = jnp.dot(lap_ref[...], x_ref[0], preferred_element_type=jnp.float32)
    o_ref[0] = out.astype(o_ref.dtype)


def _round_up(v, m):
    return ((v + m - 1) // m) * m


def _choose_batch_tile(batch, target):
    if batch <= target:
        return batch                 # tiny batch: one group, no padding
    if batch < 2 * target:
        return -(-batch // 2)        # two groups -> both v7x TensorCores get work
    return target                    # batch padded up to a multiple of target below


def local_layer(x, lap, weight=None, bias=None, *, is_weight=True,
                bt_target=32, compute_dtype=jnp.bfloat16):
    """x: (B, N, F), lap: (N, N), weight: (F, D), bias: (D,) or None -> (B, N, D)."""
    B, N, F = x.shape
    out_dtype = x.dtype
    n_pad = _round_up(N, 8)

    bt = max(1, _choose_batch_tile(B, bt_target))
    g = -(-B // bt)
    b_pad = g * bt

    # Zero-pad batch / node dims; padded lap rows/cols and padded x rows stay zero so
    # they never contaminate the real N rows (trimmed again at the end).
    if b_pad != B or n_pad != N:
        x_p = jnp.pad(x, ((0, b_pad - B), (0, n_pad - N), (0, 0)))
    else:
        x_p = x
    lap_p = jnp.pad(lap, ((0, n_pad - N), (0, n_pad - N))) if n_pad != N else lap

    # Lane-pack each group of Bt batch elements: (G, N_pad, Bt*F). Layout plumbing is
    # done once in XLA so the kernel never shuffles a lane-sparse intermediate.
    x_packed = (x_p.reshape(g, bt, n_pad, F)
                    .transpose(0, 2, 1, 3)
                    .reshape(g, n_pad, bt * F)
                    .astype(compute_dtype))
    lap_c = lap_p.astype(compute_dtype)

    x_spec = pl.BlockSpec((1, n_pad, bt * F), lambda i: (i, 0, 0))
    lap_spec = pl.BlockSpec((n_pad, n_pad), lambda i: (0, 0))
    params = pltpu.CompilerParams(dimension_semantics=("parallel",))
    itemsize = jnp.dtype(compute_dtype).itemsize
    out_itemsize = jnp.dtype(out_dtype).itemsize

    if is_weight:
        D = weight.shape[1]
        if bias is None:
            bias = jnp.zeros((D,), dtype=jnp.float32)
        # Block-diagonal weight so the first dot directly produces the lane-packed
        # (N_pad, Bt*D) slab (trades idle MXU slack for zero in-kernel shuffles).
        w_bd = jnp.kron(jnp.eye(bt, dtype=jnp.float32),
                        weight.astype(jnp.float32)).astype(compute_dtype)
        bias_t = jnp.tile(bias.astype(jnp.float32), (bt,)).reshape(1, bt * D)

        cost = pl.CostEstimate(
            flops=2 * g * (n_pad * (bt * F) * (bt * D) + n_pad * n_pad * (bt * D)),
            transcendentals=0,
            bytes_accessed=int(x_packed.size * itemsize + lap_c.size * itemsize
                               + w_bd.size * itemsize + bias_t.size * 4
                               + g * n_pad * bt * D * out_itemsize),
        )
        out_packed = pl.pallas_call(
            _weighted_kernel,
            out_shape=jax.ShapeDtypeStruct((g, n_pad, bt * D), out_dtype),
            grid_spec=pltpu.PrefetchScalarGridSpec(
                num_scalar_prefetch=0,
                grid=(g,),
                in_specs=[
                    x_spec,
                    lap_spec,
                    pl.BlockSpec((bt * F, bt * D), lambda i: (0, 0)),
                    pl.BlockSpec((1, bt * D), lambda i: (0, 0)),
                ],
                out_specs=pl.BlockSpec((1, n_pad, bt * D), lambda i: (i, 0, 0)),
            ),
            compiler_params=params,
            cost_estimate=cost,
        )(x_packed, lap_c, w_bd, bias_t)
        d_out = D
    else:
        # is_weight=False: skip the identity matmul entirely.
        cost = pl.CostEstimate(
            flops=2 * g * n_pad * n_pad * (bt * F),
            transcendentals=0,
            bytes_accessed=int(x_packed.size * itemsize + lap_c.size * itemsize
                               + g * n_pad * bt * F * out_itemsize),
        )
        out_packed = pl.pallas_call(
            _lap_only_kernel,
            out_shape=jax.ShapeDtypeStruct((g, n_pad, bt * F), out_dtype),
            grid_spec=pltpu.PrefetchScalarGridSpec(
                num_scalar_prefetch=0,
                grid=(g,),
                in_specs=[x_spec, lap_spec],
                out_specs=pl.BlockSpec((1, n_pad, bt * F), lambda i: (i, 0, 0)),
            ),
            compiler_params=params,
            cost_estimate=cost,
        )(x_packed, lap_c)
        d_out = F

    # (G, N_pad, Bt*D) -> (B, N, D). TODO(synk): drop this unpack (an extra HBM
    # read+write of the output) if the consumer can accept the packed layout.
    out = (out_packed.reshape(g, n_pad, bt, d_out)
                      .transpose(0, 2, 1, 3)
                      .reshape(b_pad, n_pad, d_out))
    return out[:B, :N, :]


if __name__ == "__main__":
    B, N = 2, 62
    in_features, out_features = 32, 16

    key = jax.random.PRNGKey(0)
    kx, klap, kw, kb = jax.random.split(key, 4)

    # uniform(-stdv, stdv) with stdv = 1/sqrt(out_features), mirroring reset_parameters()
    stdv = 1.0 / (out_features ** 0.5)
    weight = jax.random.uniform(kw, (in_features, out_features),
                                minval=-stdv, maxval=stdv, dtype=jnp.float32)
    bias = jax.random.uniform(kb, (out_features,),
                              minval=-stdv, maxval=stdv, dtype=jnp.float32)

    x = jax.random.normal(kx, (B, N, in_features), dtype=jnp.float32)
    lap = jax.random.normal(klap, (N, N), dtype=jnp.float32)

    # is_weight=True path
    out = jax.block_until_ready(local_layer(x, lap, weight, bias))
    assert out.shape == (B, N, out_features)

    cd = jnp.bfloat16
    # Reference with the same bf16 rounding points + f32 accumulation (tight check).
    xw_m = jnp.einsum('bij,jd->bid', x.astype(cd), weight.astype(cd),
                      preferred_element_type=jnp.float32)
    ref_m = jnp.einsum('ij,bjd->bid', lap.astype(cd), xw_m.astype(cd),
                       preferred_element_type=jnp.float32) + bias
    assert jnp.allclose(out, ref_m, atol=5e-2, rtol=1e-2), "mismatch vs bf16-matched reference"

    # Pure f32 reference (loose check: bf16 inputs, f32 accumulation in the kernel).
    ref_f32 = jnp.einsum('ij,bjd->bid', lap, jnp.einsum('bij,jd->bid', x, weight)) + bias
    assert jnp.allclose(out, ref_f32, atol=5e-1, rtol=1e-1), "mismatch vs f32 reference"

    # is_weight=False path (out = lap applied to the raw input).
    out_nw = jax.block_until_ready(local_layer(x, lap, is_weight=False))
    assert out_nw.shape == (B, N, in_features)
    ref_nw_m = jnp.einsum('ij,bjd->bid', lap.astype(cd), x.astype(cd),
                          preferred_element_type=jnp.float32)
    ref_nw = jnp.einsum('ij,bjd->bid', lap, x)
    assert jnp.allclose(out_nw, ref_nw_m, atol=5e-2, rtol=1e-2), "mismatch (is_weight=False)"
    assert jnp.allclose(out_nw, ref_nw, atol=5e-1, rtol=1e-1), "mismatch (is_weight=False, f32)"

    print("KERNEL_OK")
</pallas_src>

<mosaic_0001>
module attributes {stable_mosaic.version = 11 : i64} {
  func.func @_weighted_kernel(%arg0: i32, %arg1: memref<1x64x64xbf16, #tpu.memory_space<vmem>>, %arg2: memref<64x64xbf16, #tpu.memory_space<vmem>>, %arg3: memref<64x32xbf16, #tpu.memory_space<vmem>>, %arg4: memref<1x32xf32, #tpu.memory_space<vmem>>, %arg5: memref<1x64x32xf32, #tpu.memory_space<vmem>>) attributes {dimension_semantics = [#tpu.dimension_semantics<parallel>], iteration_bounds = array<i64: 1>, scalar_prefetch = 0 : i64, scratch_operands = 0 : i64, tpu.core_type = #tpu.core_type<tc>, window_params = [{transform_indices = @transform_0, window_bounds = array<i64: 1, 64, 64>}, {pipeline_mode = #tpu.pipeline_mode<synchronous>, transform_indices = @transform_1, window_bounds = array<i64: 64, 64>}, {pipeline_mode = #tpu.pipeline_mode<synchronous>, transform_indices = @transform_2, window_bounds = array<i64: 64, 32>}, {pipeline_mode = #tpu.pipeline_mode<synchronous>, transform_indices = @transform_3, window_bounds = array<i64: 1, 32>}, {transform_indices = @transform_4, window_bounds = array<i64: 1, 64, 32>}]} {
    %c0 = arith.constant 0 : index
    %c0_0 = arith.constant 0 : index
    %c0_1 = arith.constant 0 : index
    %0 = vector.load %arg1[%c0, %c0_0, %c0_1] : memref<1x64x64xbf16, #tpu.memory_space<vmem>>, vector<1x64x64xbf16>
    %1 = vector.shape_cast %0 : vector<1x64x64xbf16> to vector<64x64xbf16>
    %c0_2 = arith.constant 0 : index
    %c0_3 = arith.constant 0 : index
    %2 = vector.load %arg3[%c0_2, %c0_3] : memref<64x32xbf16, #tpu.memory_space<vmem>>, vector<64x32xbf16>
    %cst = arith.constant dense<0.000000e+00> : vector<64x32xf32>
    %3 = tpu.matmul %1, %2, %cst {dimension_numbers = #tpu.dot_dimension_numbers<[1], [0], [0], [1], [0, 0, 1, 1], [], []>} : vector<64x64xbf16>, vector<64x32xbf16>, vector<64x32xf32> -> vector<64x32xf32>
    %c0_4 = arith.constant 0 : index
    %c0_5 = arith.constant 0 : index
    %4 = vector.load %arg2[%c0_4, %c0_5] : memref<64x64xbf16, #tpu.memory_space<vmem>>, vector<64x64xbf16>
    %5 = arith.truncf %3 : vector<64x32xf32> to vector<64x32xbf16>
    %cst_6 = arith.constant dense<0.000000e+00> : vector<64x32xf32>
    %6 = tpu.matmul %4, %5, %cst_6 {dimension_numbers = #tpu.dot_dimension_numbers<[1], [0], [0], [1], [0, 0, 1, 1], [], []>} : vector<64x64xbf16>, vector<64x32xbf16>, vector<64x32xf32> -> vector<64x32xf32>
    %c0_7 = arith.constant 0 : index
    %c0_8 = arith.constant 0 : index
    %7 = vector.load %arg4[%c0_7, %c0_8] : memref<1x32xf32, #tpu.memory_space<vmem>>, vector<1x32xf32>
    %8 = vector.broadcast %7 : vector<1x32xf32> to vector<64x32xf32>
    %9 = arith.addf %6, %8 : vector<64x32xf32>
    %c0_9 = arith.constant 0 : index
    %c0_10 = arith.constant 0 : index
    %c0_11 = arith.constant 0 : index
    %10 = vector.load %arg5[%c0_9, %c0_10, %c0_11] : memref<1x64x32xf32, #tpu.memory_space<vmem>>, vector<1x64x32xf32>
    %11 = vector.shape_cast %10 : vector<1x64x32xf32> to vector<64x32xf32>
    %12 = vector.shape_cast %9 : vector<64x32xf32> to vector<1x64x32xf32>
    tpu.vector_store %arg5[%c0_9, %c0_10, %c0_11], %12 {strides = array<i32>} : memref<1x64x32xf32, #tpu.memory_space<vmem>>, vector<1x64x32xf32>,
    return
  }
  func.func @transform_0(%arg0: i32) -> (i32, i32, i32) {
    %c0_i32 = arith.constant 0 : i32
    %c0_i32_0 = arith.constant 0 : i32
    %c0_i32_1 = arith.constant 0 : i32
    return %arg0, %c0_i32, %c0_i32_0 : i32, i32, i32
  }
  func.func @transform_1(%arg0: i32) -> (i32, i32) {
    %c0_i32 = arith.constant 0 : i32
    %c0_i32_0 = arith.constant 0 : i32
    %c0_i32_1 = arith.constant 0 : i32
    return %c0_i32, %c0_i32_0 : i32, i32
  }
  func.func @transform_2(%arg0: i32) -> (i32, i32) {
    %c0_i32 = arith.constant 0 : i32
    %c0_i32_0 = arith.constant 0 : i32
    %c0_i32_1 = arith.constant 0 : i32
    return %c0_i32, %c0_i32_0 : i32, i32
  }
  func.func @transform_3(%arg0: i32) -> (i32, i32) {
    %c0_i32 = arith.constant 0 : i32
    %c0_i32_0 = arith.constant 0 : i32
    %c0_i32_1 = arith.constant 0 : i32
    return %c0_i32, %c0_i32_0 : i32, i32
  }
  func.func @transform_4(%arg0: i32) -> (i32, i32, i32) {
    %c0_i32 = arith.constant 0 : i32
    %c0_i32_0 = arith.constant 0 : i32
    %c0_i32_1 = arith.constant 0 : i32
    return %arg0, %c0_i32, %c0_i32_0 : i32, i32, i32
  }
}

</mosaic_0001>

<llo_original>
// kernel: tpu_custom_call.1
$region0: #{tpu_custom_call.1}
  #allocation0 [shape = 'u32[]', space=smem, size = 0x4, offset = 0x4, fixed_abs, tag = 'smem constant byte address 0x4 - core index']
  #allocation1 [shape = 'u32[144,128]{1,0:T(1,128)}', space=vmem, size = 0x12000, scoped, tag = 'internal scratch']
  %s0 = inlined_call_operand.vmem [shape: bf16[1,64,64], index: 0, kind: input, shape index: {}]
  %s1 = inlined_call_operand.hbm [shape: bf16[64,64], index: 1, kind: input, shape index: {}]
  %s2 = inlined_call_operand.vmem [shape: bf16[64,32], index: 2, kind: input, shape index: {}]
  %s3 = inlined_call_operand.vmem [shape: f32[1,32], index: 3, kind: input, shape index: {}]
  %s4 = inlined_call_operand.vmem [shape: f32[1,64,32], index: 4, kind: output, shape index: {}]
  %s5 = sld [smem:[#allocation0]]
  $region30: #{tpu_custom_call.1} parent=0
    _
  %s7 = ssub.s32 1, %s5
  %s8 = scalar_select 0, %s7, %s5
  $region1: #{tpu_custom_call.1} parent=0
    #allocation2 [shape = 'u8[16384]{0}', space=vmem, size = 0x4000, scoped, tag = 'input window, operand 1, single buffered']
    #allocation3 [shape = 's32[1]{0}', space=sflag, size = 0x4, scoped, tag = 'scoped memory for tpu_custom_call.1']
    %9 = vsyncpa [#allocation3], 0
    // Predicated region
    $region2: #{tpu_custom_call.1} parent=1 // pred_check
      _
    $region3: #{tpu_custom_call.1} parent=1 // pred_check_branch
      %11 = sbr.rel (0) target = $region5
    $region4: #{tpu_custom_call.1} parent=1 // pred_region
      _
    $region5: #{tpu_custom_call.1} parent=1 // pred_fallthru
      _
    // Predicated region
    $region6: #{tpu_custom_call.1} parent=1 // pred_check
      _
    $region7: #{tpu_custom_call.1} parent=1 // pred_check_branch
      %13 = sbr.rel (0) target = $region9
    $region8: #{tpu_custom_call.1} parent=1 // pred_region
      %s15 = ssub.s32 512, 512
      %16 = vsyncadd [#allocation3], %s15
      %s17 = sshll.u32 [#allocation2], 4
      %s18 = int_to_ptr.vmem [resolvable:$true] %s17
      %23 = dma.hbm_to_vmem [thread:$0]  %s1, 512, %s18, [#allocation3], 64, 64, 4
    $region9: #{tpu_custom_call.1} parent=1 // pred_fallthru
      _
    // Predicated region
    $region10: #{tpu_custom_call.1} parent=1 // pred_check
      _
    $region11: #{tpu_custom_call.1} parent=1 // pred_check_branch
      %25 = sbr.rel (0) target = $region13
    $region12: #{tpu_custom_call.1} parent=1 // pred_region
      _
    $region13: #{tpu_custom_call.1} parent=1 // pred_fallthru
      _
    // Predicated region
    $region14: #{tpu_custom_call.1} parent=1 // pred_check
      _
    $region15: #{tpu_custom_call.1} parent=1 // pred_check_branch
      %27 = sbr.rel (0) target = $region17
    $region16: #{tpu_custom_call.1} parent=1 // pred_region
      _
    $region17: #{tpu_custom_call.1} parent=1 // pred_fallthru
      _
    // Predicated region
    $region18: #{tpu_custom_call.1} parent=1 // pred_check
      _
    $region19: #{tpu_custom_call.1} parent=1 // pred_check_branch
      %29 = sbr.rel (0) target = $region21
    $region20: #{tpu_custom_call.1} parent=1 // pred_region
      %30 = dma.done [#allocation3], 512
    $region21: #{tpu_custom_call.1} parent=1 // pred_fallthru
      _
    %v32 = vld [vmem:[%s0] sm:$0xf]
    %v33 = vld [vmem:[%s0 + $0x4] sm:$0xf]
    %v34 = vld [vmem:[%s0 + $0x8] sm:$0xf]
    %v35 = vld [vmem:[%s0 + $0xc] sm:$0xf]
    %v36 = vld [vmem:[%s0 + $0x10] sm:$0xf]
    %v37 = vld [vmem:[%s0 + $0x14] sm:$0xf]
    %v38 = vld [vmem:[%s0 + $0x18] sm:$0xf]
    %v39 = vld [vmem:[%s0 + $0x1c] sm:$0xf]
    %v40 = vld [vmem:[%s2] sm:$0xf]
    %v41 = vld [vmem:[%s2 + $0x4] sm:$0xf]
    %v42 = vld [vmem:[%s2 + $0x8] sm:$0xf]
    %v43 = vld [vmem:[%s2 + $0xc] sm:$0xf]
    %v44 = vld [vmem:[%s2 + $0x10] sm:$0xf]
    %v45 = vld [vmem:[%s2 + $0x14] sm:$0xf]
    %v46 = vld [vmem:[%s2 + $0x18] sm:$0xf]
    %v47 = vld [vmem:[%s2 + $0x1c] sm:$0xf]
    %v56 = vunpack.c.l.b16 %v32
    %v57 = vunpack.c.l.b16 %v33
    %v58 = vunpack.c.l.b16 %v34
    %v59 = vunpack.c.l.b16 %v35
    %v60 = vunpack.c.l.b16 %v36
    %v61 = vunpack.c.l.b16 %v37
    %v62 = vunpack.c.l.b16 %v38
    %v63 = vunpack.c.l.b16 %v39
    %v64 = vpack.c.b16 %v57, %v56
    %v65 = vpack.c.b16 %v59, %v58
    %v66 = vpack.c.b16 %v61, %v60
    %v67 = vpack.c.b16 %v63, %v62
    %v76 = vunpack.c.l.b16 %v40
    %v77 = vunpack.c.l.b16 %v41
    %v78 = vunpack.c.l.b16 %v42
    %v79 = vunpack.c.l.b16 %v43
    %v80 = vunpack.c.l.b16 %v44
    %v81 = vunpack.c.l.b16 %v45
    %v82 = vunpack.c.l.b16 %v46
    %v83 = vunpack.c.l.b16 %v47
    %v84 = vpack.c.b16 %v77, %v76
    %v85 = vpack.c.b16 %v79, %v78
    %v86 = vpack.c.b16 %v81, %v80
    %v87 = vpack.c.b16 %v83, %v82
    %vm92 = vcmask 523264
    %v94 = vsel %vm92, %v64, 0
    %v97 = vsel %vm92, %v65, 0
    %v100 = vsel %vm92, %v66, 0
    %v103 = vsel %vm92, %v67, 0
    %105 = vmatprep.subr.bf16.mxu0 0
    %106 = vmatpush1.bf16.msra.mxu0 %v84
    %107 = vmatprep.subr.bf16.mxu0 0
    %108 = vmatpush1.bf16.msra.mxu0 %v85
    %109 = vmatprep.subr.bf16.mxu0 0
    %110 = vmatpush1.bf16.msra.mxu0 %v86
    %111 = vmatprep.subr.bf16.mxu0 0
    %112 = vmatpush1.bf16.msra.mxu0 %v87
    %113 = vmatprep.subr.bf16.mxu0 0
    %114 = vmatpush1.bf16.msra.mxu0 0
    %115 = vmatprep.subr.bf16.mxu0 0
    %116 = vmatpush1.bf16.msra.mxu0 0
    %117 = vmatprep.subr.bf16.mxu0 0
    %118 = vmatpush1.bf16.msra.mxu0 0
    %119 = vmatprep.subr.bf16.mxu0 0
    %120 = vmatpush1.bf16.msra.mxu0 0
    %121 = vmatprep.subr.bf16.mxu0 0
    %122 = vmatpush1.bf16.msra.mxu0 0
    %123 = vmatprep.subr.bf16.mxu0 0
    %124 = vmatpush1.bf16.msra.mxu0 0
    %125 = vmatprep.subr.bf16.mxu0 0
    %126 = vmatpush1.bf16.msra.mxu0 0
    %127 = vmatprep.subr.bf16.mxu0 0
    %128 = vmatpush1.bf16.msra.mxu0 0
    %129 = vmatprep.subr.bf16.mxu0 0
    %130 = vmatpush1.bf16.msra.mxu0 0
    %131 = vmatprep.subr.bf16.mxu0 0
    %132 = vmatpush1.bf16.msra.mxu0 0
    %133 = vmatprep.subr.bf16.mxu0 0
    %134 = vmatpush1.bf16.msra.mxu0 0
    %135 = vmatprep.subr.bf16.mxu0 0
    %136 = vmatpush1.bf16.msra.mxu0 0
    %137 = vmatprep.mubr.bf16.mxu0 0
    %138 = vmatmul.mubr.bf16.gmra.mrb[0].mxu0 %v94
    %v139 = vpop.f32.mrb[0].mxu0
    %v140 = vadd.f32 0.0, %v139
    %v141 = vpop.f32.mrb[0].mxu0
    %v142 = vpop.f32.mrb[0].mxu0
    %v143 = vadd.f32 0.0, %v142
    %v144 = vpop.f32.mrb[0].mxu0
    %145 = vmatprep.mubr.bf16.mxu0 0
    %146 = vmatmul.mubr.bf16.gmra.mrb[0].mxu0 %v97
    %v147 = vpop.f32.mrb[0].mxu0
    %v148 = vadd.f32 0.0, %v147
    %v149 = vpop.f32.mrb[0].mxu0
    %v150 = vpop.f32.mrb[0].mxu0
    %v151 = vadd.f32 0.0, %v150
    %v152 = vpop.f32.mrb[0].mxu0
    %153 = vmatprep.mubr.bf16.mxu0 0
    %154 = vmatmul.mubr.bf16.gmra.mrb[0].mxu0 %v100
    %v155 = vpop.f32.mrb[0].mxu0
    %v156 = vadd.f32 0.0, %v155
    %v157 = vpop.f32.mrb[0].mxu0
    %v158 = vpop.f32.mrb[0].mxu0
    %v159 = vadd.f32 0.0, %v158
    %v160 = vpop.f32.mrb[0].mxu0
    %161 = vmatprep.mubr.bf16.mxu0 0
    %162 = vmatmul.mubr.bf16.gmra.mrb[0].mxu0 %v103
    %v163 = vpop.f32.mrb[0].mxu0
    %v164 = vadd.f32 0.0, %v163
    %v165 = vpop.f32.mrb[0].mxu0
    %v166 = vpop.f32.mrb[0].mxu0
    %v167 = vadd.f32 0.0, %v166
    %v168 = vpop.f32.mrb[0].mxu0
    %169 = vdwg.mxu0
    %v170 = vld [vmem:[#allocation2] sm:$0xf]
    %v171 = vld [vmem:[#allocation2 + $0x4] sm:$0xf]
    %v172 = vld [vmem:[#allocation2 + $0x8] sm:$0xf]
    %v173 = vld [vmem:[#allocation2 + $0xc] sm:$0xf]
    %v174 = vld [vmem:[#allocation2 + $0x10] sm:$0xf]
    %v175 = vld [vmem:[#allocation2 + $0x14] sm:$0xf]
    %v176 = vld [vmem:[#allocation2 + $0x18] sm:$0xf]
    %v177 = vld [vmem:[#allocation2 + $0x1c] sm:$0xf]
    %v178 = vpack.c.bf16 %v143, %v140
    %v179 = vpack.c.bf16 %v151, %v148
    %v180 = vpack.c.bf16 %v159, %v156
    %v181 = vpack.c.bf16 %v167, %v164
    %v182 = vld [vmem:[%s3] sm:$0x1]
    %v184 = vlaneseq
    %v185 = vshrl.u32 %v184, 7
    %v186 = vsub.s32 0, %v185
    %v187 = vrot.slane %v182, %v186
    %v197 = vunpack.c.l.b16 %v170
    %v198 = vunpack.c.l.b16 %v171
    %v199 = vunpack.c.l.b16 %v172
    %v200 = vunpack.c.l.b16 %v173
    %v201 = vunpack.c.l.b16 %v174
    %v202 = vunpack.c.l.b16 %v175
    %v203 = vunpack.c.l.b16 %v176
    %v204 = vunpack.c.l.b16 %v177
    %v205 = vpack.c.b16 %v198, %v197
    %v206 = vpack.c.b16 %v200, %v199
    %v207 = vpack.c.b16 %v202, %v201
    %v208 = vpack.c.b16 %v204, %v203
    %v210 = vsel %vm92, %v205, 0
    %v213 = vsel %vm92, %v206, 0
    %v216 = vsel %vm92, %v207, 0
    %v219 = vsel %vm92, %v208, 0
    %221 = vmatprep.subr.bf16.mxu0 0
    %222 = vmatpush1.bf16.msra.mxu0 %v178
    %223 = vmatprep.subr.bf16.mxu0 0
    %224 = vmatpush1.bf16.msra.mxu0 %v179
    %225 = vmatprep.subr.bf16.mxu0 0
    %226 = vmatpush1.bf16.msra.mxu0 %v180
    %227 = vmatprep.subr.bf16.mxu0 0
    %228 = vmatpush1.bf16.msra.mxu0 %v181
    %229 = vmatprep.subr.bf16.mxu0 0
    %230 = vmatpush1.bf16.msra.mxu0 0
    %231 = vmatprep.subr.bf16.mxu0 0
    %232 = vmatpush1.bf16.msra.mxu0 0
    %233 = vmatprep.subr.bf16.mxu0 0
    %234 = vmatpush1.bf16.msra.mxu0 0
    %235 = vmatprep.subr.bf16.mxu0 0
    %236 = vmatpush1.bf16.msra.mxu0 0
    %237 = vmatprep.subr.bf16.mxu0 0
    %238 = vmatpush1.bf16.msra.mxu0 0
    %239 = vmatprep.subr.bf16.mxu0 0
    %240 = vmatpush1.bf16.msra.mxu0 0
    %241 = vmatprep.subr.bf16.mxu0 0
    %242 = vmatpush1.bf16.msra.mxu0 0
    %243 = vmatprep.subr.bf16.mxu0 0
    %244 = vmatpush1.bf16.msra.mxu0 0
    %245 = vmatprep.subr.bf16.mxu0 0
    %246 = vmatpush1.bf16.msra.mxu0 0
    %247 = vmatprep.subr.bf16.mxu0 0
    %248 = vmatpush1.bf16.msra.mxu0 0
    %249 = vmatprep.subr.bf16.mxu0 0
    %250 = vmatpush1.bf16.msra.mxu0 0
    %251 = vmatprep.subr.bf16.mxu0 0
    %252 = vmatpush1.bf16.msra.mxu0 0
    %253 = vmatprep.mubr.bf16.mxu0 0
    %254 = vmatmul.mubr.bf16.gmra.mrb[0].mxu0 %v210
    %v255 = vpop.f32.mrb[0].mxu0
    %v256 = vadd.f32 %v187, %v255
    %v257 = vpop.f32.mrb[0].mxu0
    %v258 = vpop.f32.mrb[0].mxu0
    %v259 = vadd.f32 %v187, %v258
    %v260 = vpop.f32.mrb[0].mxu0
    %261 = vmatprep.mubr.bf16.mxu0 0
    %262 = vmatmul.mubr.bf16.gmra.mrb[0].mxu0 %v213
    %v263 = vpop.f32.mrb[0].mxu0
    %v264 = vadd.f32 %v187, %v263
    %v265 = vpop.f32.mrb[0].mxu0
    %v266 = vpop.f32.mrb[0].mxu0
    %v267 = vadd.f32 %v187, %v266
    %v268 = vpop.f32.mrb[0].mxu0
    %269 = vmatprep.mubr.bf16.mxu0 0
    %270 = vmatmul.mubr.bf16.gmra.mrb[0].mxu0 %v216
    %v271 = vpop.f32.mrb[0].mxu0
    %v272 = vadd.f32 %v187, %v271
    %v273 = vpop.f32.mrb[0].mxu0
    %v274 = vpop.f32.mrb[0].mxu0
    %v275 = vadd.f32 %v187, %v274
    %v276 = vpop.f32.mrb[0].mxu0
    %277 = vmatprep.mubr.bf16.mxu0 0
    %278 = vmatmul.mubr.bf16.gmra.mrb[0].mxu0 %v219
    %v279 = vpop.f32.mrb[0].mxu0
    %v280 = vadd.f32 %v187, %v279
    %v281 = vpop.f32.mrb[0].mxu0
    %v282 = vpop.f32.mrb[0].mxu0
    %v283 = vadd.f32 %v187, %v282
    %v284 = vpop.f32.mrb[0].mxu0
    %285 = vdwg.mxu0
    %vm286 = vcmask 261120
    %287 = vst.msk [vmem:[%s4] sm:$0xff] %vm286, %v256
    %288 = vst.msk [vmem:[%s4 + $0x8] sm:$0xff] %vm286, %v259
    %289 = vst.msk [vmem:[%s4 + $0x10] sm:$0xff] %vm286, %v264
    %290 = vst.msk [vmem:[%s4 + $0x18] sm:$0xff] %vm286, %v267
    %291 = vst.msk [vmem:[%s4 + $0x20] sm:$0xff] %vm286, %v272
    %292 = vst.msk [vmem:[%s4 + $0x28] sm:$0xff] %vm286, %v275
    %293 = vst.msk [vmem:[%s4 + $0x30] sm:$0xff] %vm286, %v280
    %294 = vst.msk [vmem:[%s4 + $0x38] sm:$0xff] %vm286, %v283
    // Predicated region
    $region22: #{tpu_custom_call.1} parent=1 // pred_check
      _
    $region23: #{tpu_custom_call.1} parent=1 // pred_check_branch
      %296 = sbr.rel (0) target = $region25
    $region24: #{tpu_custom_call.1} parent=1 // pred_region
      _
    $region25: #{tpu_custom_call.1} parent=1 // pred_fallthru
      _
    // Predicated region
    $region26: #{tpu_custom_call.1} parent=1 // pred_check
      _
    $region27: #{tpu_custom_call.1} parent=1 // pred_check_branch
      %298 = sbr.rel (0) target = $region29
    $region28: #{tpu_custom_call.1} parent=1 // pred_region
      _
    $region29: #{tpu_custom_call.1} parent=1 // pred_fallthru
      _
    %299 = vsyncpa [#allocation3], 1

</llo_original>
